<compile_context>
chip_gen: v6e
topology: v6e:2x2x1
jax: 0.10.0
libtpu: 0.0.40
codegen_flags: <defaults>
</compile_context>

<pallas_src>
import functools

import jax
import jax.numpy as jnp
from jax import lax
from jax.experimental import pallas as pl
from jax.experimental.pallas import tpu as pltpu

LN_EPS = 1e-5      # PyTorch nn.LayerNorm default
LANE = 128
SUBLANE = 8


def _round_up(x, m):
    return ((x + m - 1) // m) * m


def skill_q_kernel(obs_ref, w1_ref, b1_ref, g_ref, beta_ref,
                   w2_ref, b2_ref, w3_ref, b3_ref, out_ref):
    # MXU operands in bf16, accumulation forced to f32; LN/ReLU stay f32.
    x = obs_ref[...].astype(jnp.bfloat16)

    # ---- Linear 1 ----
    h = jnp.dot(x, w1_ref[...], preferred_element_type=jnp.float32) + b1_ref[...]

    # ---- LayerNorm over last dim: one-pass statistics ----
    hidden = h.shape[-1]
    inv_n = 1.0 / float(hidden)
    s1 = jnp.sum(h, axis=-1, keepdims=True)
    s2 = jnp.sum(h * h, axis=-1, keepdims=True)
    mean = s1 * inv_n
    var = s2 * inv_n - mean * mean
    h = (h - mean) * lax.rsqrt(var + LN_EPS)
    h = h * g_ref[...] + beta_ref[...]

    # ---- ReLU ----
    h = jnp.maximum(h, 0.0)

    # ---- Linear 2 + ReLU ----
    h = jnp.dot(h.astype(jnp.bfloat16), w2_ref[...],
                preferred_element_type=jnp.float32) + b2_ref[...]
    h = jnp.maximum(h, 0.0)

    # ---- Linear 3 (skill values; lane-padded to a multiple of 128) ----
    q = jnp.dot(h.astype(jnp.bfloat16), w3_ref[...],
                preferred_element_type=jnp.float32) + b3_ref[...]
    out_ref[...] = q.astype(out_ref.dtype)


@functools.partial(jax.jit, static_argnames=("batch_tile",))
def skill_q_forward(obs, params, *, batch_tile=256):
    """obs: (B, obs_dim) float32. Returns (B, skill_dim) float32."""
    B, obs_dim = obs.shape
    w1, b1, g, beta, w2, b2, w3, b3 = params
    hidden = w1.shape[1]
    skill_dim = w3.shape[1]

    # bf16 weights for the MXU operands (f32 accumulate happens in-kernel).
    w1b = w1.astype(jnp.bfloat16)
    w2b = w2.astype(jnp.bfloat16)

    # Lane-dense output: pad skill_dim up to a multiple of 128 so the output
    # tile is written with full (unmasked) vector stores; slice afterwards.
    skill_pad = _round_up(skill_dim, LANE)
    w3b = jnp.zeros((hidden, skill_pad), jnp.bfloat16).at[:, :skill_dim].set(
        w3.astype(jnp.bfloat16))
    b3p = jnp.zeros((1, skill_pad), jnp.float32).at[:, :skill_dim].set(b3)

    # Batch tiling: large tiles fill the MXU rows and amortize per-step
    # pipeline overhead.  Ragged batches are zero-padded and sliced back.
    bt = min(batch_tile, _round_up(B, SUBLANE))
    Bp = _round_up(B, bt)
    obs_p = obs if Bp == B else jnp.pad(obs, ((0, Bp - B), (0, 0)))

    grid = (Bp // bt,)

    def rep2(shape):
        # Grid-invariant blocks (index_map always returns the same block):
        # Pallas keeps them resident in VMEM across the whole grid, so the
        # weights are DMA'd once per call.
        return pl.BlockSpec(shape, lambda i: (0, 0))

    # TODO(synk): for very large hidden (>=2048) tile w2 over a reduction
    # grid axis ("arbitrary") with an f32 VMEM accumulator instead of holding
    # the full (hidden, hidden) block resident.
    out_padded = pl.pallas_call(
        skill_q_kernel,
        out_shape=jax.ShapeDtypeStruct((Bp, skill_pad), jnp.float32),
        grid=grid,
        in_specs=[
            pl.BlockSpec((bt, obs_dim), lambda i: (i, 0)),   # obs
            rep2((obs_dim, hidden)),     # w1 (bf16)
            rep2((1, hidden)),           # b1
            rep2((1, hidden)),           # ln gamma
            rep2((1, hidden)),           # ln beta
            rep2((hidden, hidden)),      # w2 (bf16)
            rep2((1, hidden)),           # b2
            rep2((hidden, skill_pad)),   # w3 (bf16, lane-padded)
            rep2((1, skill_pad)),        # b3 (lane-padded)
        ],
        out_specs=pl.BlockSpec((bt, skill_pad), lambda i: (i, 0)),
        compiler_params=pltpu.CompilerParams(
            dimension_semantics=("parallel",),      # shards batch grid across TCs (v7x)
            vmem_limit_bytes=64 * 1024 * 1024,      # explicit budget (safe on v7x's 64 MiB)
        ),
    )(obs_p, w1b, b1, g, beta, w2b, b2, w3b, b3p)

    return out_padded[:B, :skill_dim]


def init_params(key, obs_dim, hidden, skill_dim):
    """Deterministic init mirroring utils.weight_init: orthogonal W, zero b,
    LayerNorm gamma=1, beta=0. Weights stored as (in, out)."""
    k1, k2, k3 = jax.random.split(key, 3)
    ortho = jax.nn.initializers.orthogonal()
    w1 = ortho(k1, (obs_dim, hidden), jnp.float32)
    w2 = ortho(k2, (hidden, hidden), jnp.float32)
    w3 = ortho(k3, (hidden, skill_dim), jnp.float32)
    b1 = jnp.zeros((1, hidden), jnp.float32)
    b2 = jnp.zeros((1, hidden), jnp.float32)
    b3 = jnp.zeros((1, skill_dim), jnp.float32)
    g = jnp.ones((1, hidden), jnp.float32)
    beta = jnp.zeros((1, hidden), jnp.float32)
    return (w1, b1, g, beta, w2, b2, w3, b3)


def reference_forward(obs, params):
    """Pure-JAX reference mirroring the kernel's bf16 matmul operands."""
    w1, b1, g, beta, w2, b2, w3, b3 = params

    def mm(x, w):
        return jnp.dot(x.astype(jnp.bfloat16), w.astype(jnp.bfloat16),
                       preferred_element_type=jnp.float32)

    h = mm(obs, w1) + b1
    mean = h.mean(-1, keepdims=True)
    var = ((h - mean) ** 2).mean(-1, keepdims=True)
    h = (h - mean) / jnp.sqrt(var + LN_EPS)
    h = h * g + beta
    h = jnp.maximum(h, 0.0)
    h = jnp.maximum(mm(h, w2) + b2, 0.0)
    return mm(h, w3) + b3


if __name__ == "__main__":
    key = jax.random.PRNGKey(0)
    k_obs, k_params = jax.random.split(key)

    # Case 1: tiny shapes (single grid step; tile shrinks to fit the batch).
    B, obs_dim, hidden, skill_dim = 8, 32, 32, 8
    obs = jax.random.normal(k_obs, (B, obs_dim), jnp.float32)
    params = init_params(k_params, obs_dim, hidden, skill_dim)

    q = jax.block_until_ready(skill_q_forward(obs, params))
    q_ref = reference_forward(obs, params)
    assert q.shape == (B, skill_dim)
    assert jnp.allclose(q, q_ref, atol=5e-2, rtol=5e-2), "case1 mismatch vs reference"

    # Case 2: ragged batch + multi-step grid + lane padding of skill_dim.
    k3, k4 = jax.random.split(k_params)
    B2, obs2, hid2, sk2 = 500, 64, 128, 10
    obs_b = jax.random.normal(k3, (B2, obs2), jnp.float32)
    params_b = init_params(k4, obs2, hid2, sk2)

    q2 = jax.block_until_ready(skill_q_forward(obs_b, params_b, batch_tile=256))
    q2_ref = reference_forward(obs_b, params_b)
    assert q2.shape == (B2, sk2)
    assert jnp.allclose(q2, q2_ref, atol=5e-2, rtol=5e-2), "case2 mismatch vs reference"

    print("KERNEL_OK")
</pallas_src>

<mosaic_0001>
module attributes {stable_mosaic.version = 11 : i64} {
  func.func @skill_q_kernel(%arg0: i32, %arg1: memref<8x32xf32, #tpu.memory_space<vmem>>, %arg2: memref<32x32xbf16, #tpu.memory_space<vmem>>, %arg3: memref<1x32xf32, #tpu.memory_space<vmem>>, %arg4: memref<1x32xf32, #tpu.memory_space<vmem>>, %arg5: memref<1x32xf32, #tpu.memory_space<vmem>>, %arg6: memref<32x32xbf16, #tpu.memory_space<vmem>>, %arg7: memref<1x32xf32, #tpu.memory_space<vmem>>, %arg8: memref<32x128xbf16, #tpu.memory_space<vmem>>, %arg9: memref<1x128xf32, #tpu.memory_space<vmem>>, %arg10: memref<8x128xf32, #tpu.memory_space<vmem>>) attributes {dimension_semantics = [#tpu.dimension_semantics<parallel>], iteration_bounds = array<i64: 1>, scalar_prefetch = 0 : i64, scratch_operands = 0 : i64, tpu.core_type = #tpu.core_type<tc>, window_params = [{transform_indices = @transform_0, window_bounds = array<i64: 8, 32>}, {pipeline_mode = #tpu.pipeline_mode<synchronous>, transform_indices = @transform_1, window_bounds = array<i64: 32, 32>}, {pipeline_mode = #tpu.pipeline_mode<synchronous>, transform_indices = @transform_2, window_bounds = array<i64: 1, 32>}, {pipeline_mode = #tpu.pipeline_mode<synchronous>, transform_indices = @transform_3, window_bounds = array<i64: 1, 32>}, {pipeline_mode = #tpu.pipeline_mode<synchronous>, transform_indices = @transform_4, window_bounds = array<i64: 1, 32>}, {pipeline_mode = #tpu.pipeline_mode<synchronous>, transform_indices = @transform_5, window_bounds = array<i64: 32, 32>}, {pipeline_mode = #tpu.pipeline_mode<synchronous>, transform_indices = @transform_6, window_bounds = array<i64: 1, 32>}, {pipeline_mode = #tpu.pipeline_mode<synchronous>, transform_indices = @transform_7, window_bounds = array<i64: 32, 128>}, {pipeline_mode = #tpu.pipeline_mode<synchronous>, transform_indices = @transform_8, window_bounds = array<i64: 1, 128>}, {transform_indices = @transform_9, window_bounds = array<i64: 8, 128>}]} {
    %c0 = arith.constant 0 : index
    %c0_0 = arith.constant 0 : index
    %0 = vector.load %arg1[%c0, %c0_0] : memref<8x32xf32, #tpu.memory_space<vmem>>, vector<8x32xf32>
    %1 = arith.truncf %0 : vector<8x32xf32> to vector<8x32xbf16>
    %c0_1 = arith.constant 0 : index
    %c0_2 = arith.constant 0 : index
    %2 = vector.load %arg2[%c0_1, %c0_2] : memref<32x32xbf16, #tpu.memory_space<vmem>>, vector<32x32xbf16>
    %cst = arith.constant dense<0.000000e+00> : vector<8x32xf32>
    %3 = tpu.matmul %1, %2, %cst {dimension_numbers = #tpu.dot_dimension_numbers<[1], [0], [0], [1], [0, 0, 1, 1], [], []>} : vector<8x32xbf16>, vector<32x32xbf16>, vector<8x32xf32> -> vector<8x32xf32>
    %c0_3 = arith.constant 0 : index
    %c0_4 = arith.constant 0 : index
    %4 = vector.load %arg3[%c0_3, %c0_4] : memref<1x32xf32, #tpu.memory_space<vmem>>, vector<1x32xf32>
    %5 = vector.broadcast %4 : vector<1x32xf32> to vector<8x32xf32>
    %6 = arith.addf %3, %5 : vector<8x32xf32>
    %cst_5 = arith.constant dense<0.000000e+00> : vector<8xf32>
    %7 = vector.multi_reduction <add>, %6, %cst_5 [1] : vector<8x32xf32> to vector<8xf32>
    %8 = vector.shape_cast %7 : vector<8xf32> to vector<8x1xf32>
    %9 = arith.mulf %6, %6 : vector<8x32xf32>
    %cst_6 = arith.constant dense<0.000000e+00> : vector<8xf32>
    %10 = vector.multi_reduction <add>, %9, %cst_6 [1] : vector<8x32xf32> to vector<8xf32>
    %11 = vector.shape_cast %10 : vector<8xf32> to vector<8x1xf32>
    %cst_7 = arith.constant 3.125000e-02 : f32
    %12 = vector.broadcast %cst_7 : f32 to vector<8x1xf32>
    %13 = arith.mulf %8, %12 : vector<8x1xf32>
    %cst_8 = arith.constant 3.125000e-02 : f32
    %14 = vector.broadcast %cst_8 : f32 to vector<8x1xf32>
    %15 = arith.mulf %11, %14 : vector<8x1xf32>
    %16 = arith.mulf %13, %13 : vector<8x1xf32>
    %17 = arith.subf %15, %16 : vector<8x1xf32>
    %18 = vector.broadcast %13 : vector<8x1xf32> to vector<8x32xf32>
    %19 = arith.subf %6, %18 : vector<8x32xf32>
    %cst_9 = arith.constant 9.99999974E-6 : f32
    %20 = vector.broadcast %cst_9 : f32 to vector<8x1xf32>
    %21 = arith.addf %17, %20 : vector<8x1xf32>
    %22 = math.rsqrt %21 : vector<8x1xf32>
    %23 = vector.broadcast %22 : vector<8x1xf32> to vector<8x32xf32>
    %24 = arith.mulf %19, %23 : vector<8x32xf32>
    %c0_10 = arith.constant 0 : index
    %c0_11 = arith.constant 0 : index
    %25 = vector.load %arg4[%c0_10, %c0_11] : memref<1x32xf32, #tpu.memory_space<vmem>>, vector<1x32xf32>
    %26 = vector.broadcast %25 : vector<1x32xf32> to vector<8x32xf32>
    %27 = arith.mulf %24, %26 : vector<8x32xf32>
    %c0_12 = arith.constant 0 : index
    %c0_13 = arith.constant 0 : index
    %28 = vector.load %arg5[%c0_12, %c0_13] : memref<1x32xf32, #tpu.memory_space<vmem>>, vector<1x32xf32>
    %29 = vector.broadcast %28 : vector<1x32xf32> to vector<8x32xf32>
    %30 = arith.addf %27, %29 : vector<8x32xf32>
    %cst_14 = arith.constant 0.000000e+00 : f32
    %31 = vector.broadcast %cst_14 : f32 to vector<8x32xf32>
    %32 = arith.maximumf %30, %31 : vector<8x32xf32>
    %33 = arith.truncf %32 : vector<8x32xf32> to vector<8x32xbf16>
    %c0_15 = arith.constant 0 : index
    %c0_16 = arith.constant 0 : index
    %34 = vector.load %arg6[%c0_15, %c0_16] : memref<32x32xbf16, #tpu.memory_space<vmem>>, vector<32x32xbf16>
    %cst_17 = arith.constant dense<0.000000e+00> : vector<8x32xf32>
    %35 = tpu.matmul %33, %34, %cst_17 {dimension_numbers = #tpu.dot_dimension_numbers<[1], [0], [0], [1], [0, 0, 1, 1], [], []>} : vector<8x32xbf16>, vector<32x32xbf16>, vector<8x32xf32> -> vector<8x32xf32>
    %c0_18 = arith.constant 0 : index
    %c0_19 = arith.constant 0 : index
    %36 = vector.load %arg7[%c0_18, %c0_19] : memref<1x32xf32, #tpu.memory_space<vmem>>, vector<1x32xf32>
    %37 = vector.broadcast %36 : vector<1x32xf32> to vector<8x32xf32>
    %38 = arith.addf %35, %37 : vector<8x32xf32>
    %cst_20 = arith.constant 0.000000e+00 : f32
    %39 = vector.broadcast %cst_20 : f32 to vector<8x32xf32>
    %40 = arith.maximumf %38, %39 : vector<8x32xf32>
    %41 = arith.truncf %40 : vector<8x32xf32> to vector<8x32xbf16>
    %c0_21 = arith.constant 0 : index
    %c0_22 = arith.constant 0 : index
    %42 = vector.load %arg8[%c0_21, %c0_22] : memref<32x128xbf16, #tpu.memory_space<vmem>>, vector<32x128xbf16>
    %cst_23 = arith.constant dense<0.000000e+00> : vector<8x128xf32>
    %43 = tpu.matmul %41, %42, %cst_23 {dimension_numbers = #tpu.dot_dimension_numbers<[1], [0], [0], [1], [0, 0, 1, 1], [], []>} : vector<8x32xbf16>, vector<32x128xbf16>, vector<8x128xf32> -> vector<8x128xf32>
    %c0_24 = arith.constant 0 : index
    %c0_25 = arith.constant 0 : index
    %44 = vector.load %arg9[%c0_24, %c0_25] : memref<1x128xf32, #tpu.memory_space<vmem>>, vector<1x128xf32>
    %45 = vector.broadcast %44 : vector<1x128xf32> to vector<8x128xf32>
    %46 = arith.addf %43, %45 : vector<8x128xf32>
    %c0_26 = arith.constant 0 : index
    %c0_27 = arith.constant 0 : index
    %47 = vector.load %arg10[%c0_26, %c0_27] : memref<8x128xf32, #tpu.memory_space<vmem>>, vector<8x128xf32>
    tpu.vector_store %arg10[%c0_26, %c0_27], %46 {strides = array<i32>} : memref<8x128xf32, #tpu.memory_space<vmem>>, vector<8x128xf32>,
    return
  }
  func.func @transform_0(%arg0: i32) -> (i32, i32) {
    %c0_i32 = arith.constant 0 : i32
    %c0_i32_0 = arith.constant 0 : i32
    return %arg0, %c0_i32 : i32, i32
  }
  func.func @transform_1(%arg0: i32) -> (i32, i32) {
    %c0_i32 = arith.constant 0 : i32
    %c0_i32_0 = arith.constant 0 : i32
    %c0_i32_1 = arith.constant 0 : i32
    return %c0_i32, %c0_i32_0 : i32, i32
  }
  func.func @transform_2(%arg0: i32) -> (i32, i32) {
    %c0_i32 = arith.constant 0 : i32
    %c0_i32_0 = arith.constant 0 : i32
    %c0_i32_1 = arith.constant 0 : i32
    return %c0_i32, %c0_i32_0 : i32, i32
  }
  func.func @transform_3(%arg0: i32) -> (i32, i32) {
    %c0_i32 = arith.constant 0 : i32
    %c0_i32_0 = arith.constant 0 : i32
    %c0_i32_1 = arith.constant 0 : i32
    return %c0_i32, %c0_i32_0 : i32, i32
  }
  func.func @transform_4(%arg0: i32) -> (i32, i32) {
    %c0_i32 = arith.constant 0 : i32
    %c0_i32_0 = arith.constant 0 : i32
    %c0_i32_1 = arith.constant 0 : i32
    return %c0_i32, %c0_i32_0 : i32, i32
  }
  func.func @transform_5(%arg0: i32) -> (i32, i32) {
    %c0_i32 = arith.constant 0 : i32
    %c0_i32_0 = arith.constant 0 : i32
    %c0_i32_1 = arith.constant 0 : i32
    return %c0_i32, %c0_i32_0 : i32, i32
  }
  func.func @transform_6(%arg0: i32) -> (i32, i32) {
    %c0_i32 = arith.constant 0 : i32
    %c0_i32_0 = arith.constant 0 : i32
    %c0_i32_1 = arith.constant 0 : i32
    return %c0_i32, %c0_i32_0 : i32, i32
  }
  func.func @transform_7(%arg0: i32) -> (i32, i32) {
    %c0_i32 = arith.constant 0 : i32
    %c0_i32_0 = arith.constant 0 : i32
    %c0_i32_1 = arith.constant 0 : i32
    return %c0_i32, %c0_i32_0 : i32, i32
  }
  func.func @transform_8(%arg0: i32) -> (i32, i32) {
    %c0_i32 = arith.constant 0 : i32
    %c0_i32_0 = arith.constant 0 : i32
    %c0_i32_1 = arith.constant 0 : i32
    return %c0_i32, %c0_i32_0 : i32, i32
  }
  func.func @transform_9(%arg0: i32) -> (i32, i32) {
    %c0_i32 = arith.constant 0 : i32
    %c0_i32_0 = arith.constant 0 : i32
    return %arg0, %c0_i32 : i32, i32
  }
}

</mosaic_0001>

<llo_original>
// kernel: skill_q_forward.1
$region0: #{skill_q_forward.1}
  #allocation0 [shape = 'u32[]', space=smem, size = 0x4, offset = 0x4, fixed_abs, tag = 'smem constant byte address 0x4 - core index']
  #allocation1 [shape = 'u32[144,128]{1,0:T(1,128)}', space=vmem, size = 0x12000, scoped, tag = 'internal scratch']
  %s0 = inlined_call_operand.vmem [shape: f32[8,32], index: 0, kind: input, shape index: {}]
  %s1 = inlined_call_operand.vmem [shape: bf16[32,32], index: 1, kind: input, shape index: {}]
  %s2 = inlined_call_operand.vmem [shape: f32[1,32], index: 2, kind: input, shape index: {}]
  %s3 = inlined_call_operand.vmem [shape: f32[1,32], index: 3, kind: input, shape index: {}]
  %s4 = inlined_call_operand.vmem [shape: f32[1,32], index: 4, kind: input, shape index: {}]
  %s5 = inlined_call_operand.vmem [shape: bf16[32,32], index: 5, kind: input, shape index: {}]
  %s6 = inlined_call_operand.vmem [shape: f32[1,32], index: 6, kind: input, shape index: {}]
  %s7 = inlined_call_operand.vmem [shape: bf16[32,128], index: 7, kind: input, shape index: {}]
  %s8 = inlined_call_operand.vmem [shape: f32[1,128], index: 8, kind: input, shape index: {}]
  %s9 = inlined_call_operand.hbm [shape: f32[8,128], index: 9, kind: output, shape index: {}]
  %s10 = sld [smem:[#allocation0]]
  $region46: #{skill_q_forward.1} parent=0
    _
  %s12 = ssub.s32 1, %s10
  %s13 = scalar_select 0, %s12, %s10
  $region1: #{skill_q_forward.1} parent=0
    #allocation2 [shape = 'u8[4096]{0}', space=vmem, size = 0x1000, scoped, tag = 'output window, operand 0, single buffered']
    #allocation3 [shape = 's32[1]{0}', space=sflag, size = 0x4, scoped, tag = 'scoped memory for skill_q_forward.1']
    %14 = vsyncpa [#allocation3], 0
    // Predicated region
    $region2: #{skill_q_forward.1} parent=1 // pred_check
      _
    $region3: #{skill_q_forward.1} parent=1 // pred_check_branch
      %16 = sbr.rel (0) target = $region5
    $region4: #{skill_q_forward.1} parent=1 // pred_region
      _
    $region5: #{skill_q_forward.1} parent=1 // pred_fallthru
      _
    // Predicated region
    $region6: #{skill_q_forward.1} parent=1 // pred_check
      _
    $region7: #{skill_q_forward.1} parent=1 // pred_check_branch
      %18 = sbr.rel (0) target = $region9
    $region8: #{skill_q_forward.1} parent=1 // pred_region
      _
    $region9: #{skill_q_forward.1} parent=1 // pred_fallthru
      _
    // Predicated region
    $region10: #{skill_q_forward.1} parent=1 // pred_check
      _
    $region11: #{skill_q_forward.1} parent=1 // pred_check_branch
      %20 = sbr.rel (0) target = $region13
    $region12: #{skill_q_forward.1} parent=1 // pred_region
      _
    $region13: #{skill_q_forward.1} parent=1 // pred_fallthru
      _
    // Predicated region
    $region14: #{skill_q_forward.1} parent=1 // pred_check
      _
    $region15: #{skill_q_forward.1} parent=1 // pred_check_branch
      %22 = sbr.rel (0) target = $region17
    $region16: #{skill_q_forward.1} parent=1 // pred_region
      _
    $region17: #{skill_q_forward.1} parent=1 // pred_fallthru
      _
    // Predicated region
    $region18: #{skill_q_forward.1} parent=1 // pred_check
      _
    $region19: #{skill_q_forward.1} parent=1 // pred_check_branch
      %24 = sbr.rel (0) target = $region21
    $region20: #{skill_q_forward.1} parent=1 // pred_region
      _
    $region21: #{skill_q_forward.1} parent=1 // pred_fallthru
      _
    // Predicated region
    $region22: #{skill_q_forward.1} parent=1 // pred_check
      _
    $region23: #{skill_q_forward.1} parent=1 // pred_check_branch
      %26 = sbr.rel (0) target = $region25
    $region24: #{skill_q_forward.1} parent=1 // pred_region
      _
    $region25: #{skill_q_forward.1} parent=1 // pred_fallthru
      _
    // Predicated region
    $region26: #{skill_q_forward.1} parent=1 // pred_check
      _
    $region27: #{skill_q_forward.1} parent=1 // pred_check_branch
      %28 = sbr.rel (0) target = $region29
    $region28: #{skill_q_forward.1} parent=1 // pred_region
      _
    $region29: #{skill_q_forward.1} parent=1 // pred_fallthru
      _
    // Predicated region
    $region30: #{skill_q_forward.1} parent=1 // pred_check
      _
    $region31: #{skill_q_forward.1} parent=1 // pred_check_branch
      %30 = sbr.rel (0) target = $region33
    $region32: #{skill_q_forward.1} parent=1 // pred_region
      _
    $region33: #{skill_q_forward.1} parent=1 // pred_fallthru
      _
    // Predicated region
    $region34: #{skill_q_forward.1} parent=1 // pred_check
      _
    $region35: #{skill_q_forward.1} parent=1 // pred_check_branch
      %32 = sbr.rel (0) target = $region37
    $region36: #{skill_q_forward.1} parent=1 // pred_region
      _
    $region37: #{skill_q_forward.1} parent=1 // pred_fallthru
      _
    %v34 = vld [vmem:[%s0] sm:$0xff]
    %v35 = vpack.c.bf16 %v34, %v34
    %v36 = vld [vmem:[%s1] sm:$0xf]
    %v37 = vld [vmem:[%s1 + $0x4] sm:$0xf]
    %v38 = vld [vmem:[%s1 + $0x8] sm:$0xf]
    %v39 = vld [vmem:[%s1 + $0xc] sm:$0xf]
    %v40 = vld [vmem:[%s2] sm:$0x1]
    %v42 = vlaneseq
    %v43 = vshrl.u32 %v42, 7
    %v44 = vsub.s32 0, %v43
    %v45 = vrot.slane %v40, %v44
    %v51 = vunpack.c.l.b16 %v36
    %v52 = vunpack.c.l.b16 %v37
    %v53 = vunpack.c.l.b16 %v38
    %v54 = vunpack.c.l.b16 %v39
    %v55 = vpack.c.b16 %v52, %v51
    %v56 = vpack.c.b16 %v54, %v53
    %vm59 = vcmask 261120
    %v61 = vsel %vm59, %v35, 0
    %63 = vmatprep.subr.bf16.mxu0 0
    %64 = vmatpush1.bf16.msra.mxu0 0
    %65 = vmatprep.subr.bf16.mxu0 0
    %66 = vmatpush1.bf16.msra.mxu0 0
    %67 = vmatprep.subr.bf16.mxu0 0
    %68 = vmatpush1.bf16.msra.mxu0 0
    %69 = vmatprep.subr.bf16.mxu0 0
    %70 = vmatpush1.bf16.msra.mxu0 0
    %71 = vmatprep.subr.bf16.mxu0 0
    %72 = vmatpush1.bf16.msra.mxu0 0
    %73 = vmatprep.subr.bf16.mxu0 0
    %74 = vmatpush1.bf16.msra.mxu0 0
    %75 = vmatprep.subr.bf16.mxu0 0
    %76 = vmatpush1.bf16.msra.mxu0 %v56
    %77 = vmatprep.subr.bf16.mxu0 0
    %78 = vmatpush1.bf16.msra.mxu0 %v55
    %79 = vmatprep.subr.bf16.mxu0 0
    %80 = vmatpush2.bf16.msra.mxu0 0
    %81 = vmatprep.subr.bf16.mxu0 0
    %82 = vmatpush2.bf16.msra.mxu0 0
    %83 = vmatprep.subr.bf16.mxu0 0
    %84 = vmatpush2.bf16.msra.mxu0 0
    %85 = vmatprep.subr.bf16.mxu0 0
    %86 = vmatpush2.bf16.msra.mxu0 0
    %87 = vmatprep.subr.bf16.mxu0 0
    %88 = vmatpush2.bf16.msra.mxu0 0
    %89 = vmatprep.subr.bf16.mxu0 0
    %90 = vmatpush2.bf16.msra.mxu0 0
    %91 = vmatprep.subr.bf16.mxu0 0
    %92 = vmatpush2.bf16.msra.mxu0 0
    %93 = vmatprep.subr.bf16.mxu0 0
    %94 = vmatpush2.bf16.msra.mxu0 0
    %95 = vmatprep.mubr.bf16.mxu0 0
    %96 = vmatmul.mubr.bf16.gmra.mxu0 %v61
    %v97 = vpop.f32.mrf.mxu0
    %v98 = vadd.f32 %v45, %v97
    %v99 = vpop.f32.mrf.mxu0
    %v100 = vpop.f32.mrf.mxu0
    %v101 = vpop.f32.mrf.mxu0
    %102 = vdwg.mxu0
    %v103 = vsel %vm59, %v98, 0.0
    %104 = vadd.xlane.f32.xlu0 %v103
    %v105 = vpop.xlane.xlu0 %104
    %v106 = vmul.f32 %v98, %v98
    %v107 = vsel %vm59, %v106, 0.0
    %108 = vadd.xlane.f32.xlu0 %v107
    %v109 = vpop.xlane.xlu0 %108
    %v110 = vmul.f32 %v105, 0.03125
    %v111 = vmul.f32 %v109, 0.03125
    %v112 = vmul.f32 %v110, %v110
    %v113 = vsub.f32 %v111, %v112
    %v114 = vsub.f32 %v98, %v110
    %v115 = vadd.f32 %v113, 1e-05
    %v116 = vrsqrt.pop %v115
    %v117 = vmul.f32 %v114, %v116
    %v118 = vld [vmem:[%s3] sm:$0x1]
    %v120 = vlaneseq
    %v121 = vshrl.u32 %v120, 7
    %v122 = vsub.s32 0, %v121
    %v123 = vrot.slane %v118, %v122
    %v125 = vmul.f32 %v117, %v123
    %v126 = vld [vmem:[%s4] sm:$0x1]
    %v128 = vlaneseq
    %v129 = vshrl.u32 %v128, 7
    %v130 = vsub.s32 0, %v129
    %v131 = vrot.slane %v126, %v130
    %v133 = vadd.f32 %v125, %v131
    %v134 = vmax.f32 %v133, 0.0
    %v135 = vpack.c.bf16 %v134, %v134
    %v136 = vld [vmem:[%s5] sm:$0xf]
    %v137 = vld [vmem:[%s5 + $0x4] sm:$0xf]
    %v138 = vld [vmem:[%s5 + $0x8] sm:$0xf]
    %v139 = vld [vmem:[%s5 + $0xc] sm:$0xf]
    %v140 = vld [vmem:[%s6] sm:$0x1]
    %v142 = vlaneseq
    %v143 = vshrl.u32 %v142, 7
    %v144 = vsub.s32 0, %v143
    %v145 = vrot.slane %v140, %v144
    %v151 = vunpack.c.l.b16 %v136
    %v152 = vunpack.c.l.b16 %v137
    %v153 = vunpack.c.l.b16 %v138
    %v154 = vunpack.c.l.b16 %v139
    %v155 = vpack.c.b16 %v152, %v151
    %v156 = vpack.c.b16 %v154, %v153
    %v160 = vsel %vm59, %v135, 0
    %162 = vmatprep.subr.bf16.mxu0 0
    %163 = vmatpush1.bf16.msra.mxu0 0
    %164 = vmatprep.subr.bf16.mxu0 0
    %165 = vmatpush1.bf16.msra.mxu0 0
    %166 = vmatprep.subr.bf16.mxu0 0
    %167 = vmatpush1.bf16.msra.mxu0 0
    %168 = vmatprep.subr.bf16.mxu0 0
    %169 = vmatpush1.bf16.msra.mxu0 0
    %170 = vmatprep.subr.bf16.mxu0 0
    %171 = vmatpush1.bf16.msra.mxu0 0
    %172 = vmatprep.subr.bf16.mxu0 0
    %173 = vmatpush1.bf16.msra.mxu0 0
    %174 = vmatprep.subr.bf16.mxu0 0
    %175 = vmatpush1.bf16.msra.mxu0 %v156
    %176 = vmatprep.subr.bf16.mxu0 0
    %177 = vmatpush1.bf16.msra.mxu0 %v155
    %178 = vmatprep.subr.bf16.mxu0 0
    %179 = vmatpush2.bf16.msra.mxu0 0
    %180 = vmatprep.subr.bf16.mxu0 0
    %181 = vmatpush2.bf16.msra.mxu0 0
    %182 = vmatprep.subr.bf16.mxu0 0
    %183 = vmatpush2.bf16.msra.mxu0 0
    %184 = vmatprep.subr.bf16.mxu0 0
    %185 = vmatpush2.bf16.msra.mxu0 0
    %186 = vmatprep.subr.bf16.mxu0 0
    %187 = vmatpush2.bf16.msra.mxu0 0
    %188 = vmatprep.subr.bf16.mxu0 0
    %189 = vmatpush2.bf16.msra.mxu0 0
    %190 = vmatprep.subr.bf16.mxu0 0
    %191 = vmatpush2.bf16.msra.mxu0 0
    %192 = vmatprep.subr.bf16.mxu0 0
    %193 = vmatpush2.bf16.msra.mxu0 0
    %194 = vmatprep.mubr.bf16.mxu0 0
    %195 = vmatmul.mubr.bf16.gmra.mxu0 %v160
    %v196 = vpop.f32.mrf.mxu0
    %v197 = vadd.f32 %v145, %v196
    %v198 = vpop.f32.mrf.mxu0
    %v199 = vpop.f32.mrf.mxu0
    %v200 = vpop.f32.mrf.mxu0
    %201 = vdwg.mxu0
    %v202 = vmax.f32 %v197, 0.0
    %v203 = vpack.c.bf16 %v202, %v202
    %v204 = vld [vmem:[%s7] sm:$0xf]
    %v205 = vld [vmem:[%s7 + $0x4] sm:$0xf]
    %v206 = vld [vmem:[%s7 + $0x8] sm:$0xf]
    %v207 = vld [vmem:[%s7 + $0xc] sm:$0xf]
    %v208 = vld [vmem:[%s8] sm:$0x1]
    %v210 = vlaneseq
    %v211 = vshrl.u32 %v210, 7
    %v212 = vsub.s32 0, %v211
    %v213 = vrot.slane %v208, %v212
    %v219 = vunpack.c.l.b16 %v204
    %v220 = vunpack.c.l.b16 %v205
    %v221 = vunpack.c.l.b16 %v206
    %v222 = vunpack.c.l.b16 %v207
    %v223 = vpack.c.b16 %v220, %v219
    %v224 = vpack.c.b16 %v222, %v221
    %v228 = vsel %vm59, %v203, 0
    %230 = vmatprep.subr.bf16.mxu0 0
    %231 = vmatpush1.bf16.msra.mxu0 0
    %232 = vmatprep.subr.bf16.mxu0 0
    %233 = vmatpush1.bf16.msra.mxu0 0
    %234 = vmatprep.subr.bf16.mxu0 0
    %235 = vmatpush1.bf16.msra.mxu0 0
    %236 = vmatprep.subr.bf16.mxu0 0
    %237 = vmatpush1.bf16.msra.mxu0 0
    %238 = vmatprep.subr.bf16.mxu0 0
    %239 = vmatpush1.bf16.msra.mxu0 0
    %240 = vmatprep.subr.bf16.mxu0 0
    %241 = vmatpush1.bf16.msra.mxu0 0
    %242 = vmatprep.subr.bf16.mxu0 0
    %243 = vmatpush1.bf16.msra.mxu0 %v224
    %244 = vmatprep.subr.bf16.mxu0 0
    %245 = vmatpush1.bf16.msra.mxu0 %v223
    %246 = vmatprep.subr.bf16.mxu0 0
    %247 = vmatpush2.bf16.msra.mxu0 0
    %248 = vmatprep.subr.bf16.mxu0 0
    %249 = vmatpush2.bf16.msra.mxu0 0
    %250 = vmatprep.subr.bf16.mxu0 0
    %251 = vmatpush2.bf16.msra.mxu0 0
    %252 = vmatprep.subr.bf16.mxu0 0
    %253 = vmatpush2.bf16.msra.mxu0 0
    %254 = vmatprep.subr.bf16.mxu0 0
    %255 = vmatpush2.bf16.msra.mxu0 0
    %256 = vmatprep.subr.bf16.mxu0 0
    %257 = vmatpush2.bf16.msra.mxu0 0
    %258 = vmatprep.subr.bf16.mxu0 0
    %259 = vmatpush2.bf16.msra.mxu0 0
    %260 = vmatprep.subr.bf16.mxu0 0
    %261 = vmatpush2.bf16.msra.mxu0 0
    %262 = vmatprep.mubr.bf16.mxu0 0
    %263 = vmatmul.mubr.bf16.gmra.mxu0 %v228
    %v264 = vpop.f32.mrf.mxu0
    %v265 = vadd.f32 %v213, %v264
    %v266 = vpop.f32.mrf.mxu0
    %v267 = vpop.f32.mrf.mxu0
    %v268 = vpop.f32.mrf.mxu0
    %269 = vdwg.mxu0
    %270 = vst [vmem:[#allocation2] sm:$0xff] %v265
    // Predicated region
    $region38: #{skill_q_forward.1} parent=1 // pred_check
      _
    $region39: #{skill_q_forward.1} parent=1 // pred_check_branch
      %272 = sbr.rel (0) target = $region41
    $region40: #{skill_q_forward.1} parent=1 // pred_region
      %s274 = ssub.s32 128, 128
      %275 = vsyncadd [#allocation3], %s274
      %s277 = sshll.u32 [#allocation2], 4
      %s278 = int_to_ptr.vmem [resolvable:$true] %s277
      %280 = dma.vmem_to_hbm [thread:$0]  %s278, 128, %s9, [#allocation3]
    $region41: #{skill_q_forward.1} parent=1 // pred_fallthru
      _
    // Predicated region
    $region42: #{skill_q_forward.1} parent=1 // pred_check
      _
    $region43: #{skill_q_forward.1} parent=1 // pred_check_branch
      %282 = sbr.rel (0) target = $region45
    $region44: #{skill_q_forward.1} parent=1 // pred_region
      %283 = dma.done [#allocation3], 128
    $region45: #{skill_q_forward.1} parent=1 // pred_fallthru
      _
    %284 = vsyncpa [#allocation3], 1

</llo_original>
